<compile_context>
chip_gen: v5e
topology: v5e:2x2
jax: 0.10.0
libtpu: 0.0.40
codegen_flags: <defaults>
</compile_context>

<pallas_src>
import math

import jax
import jax.numpy as jnp
from jax.experimental import pallas as pl
from jax.experimental.pallas import tpu as pltpu


# ----------------------------------------------------------------------------
# Deterministic sinusoidal table, identical to the PyTorch buffer.
# ----------------------------------------------------------------------------
def make_positional_encoding_table(d_model: int, max_len: int = 500) -> jnp.ndarray:
    position = jnp.arange(0, max_len, dtype=jnp.float32)[:, None]            # (max_len, 1)
    div_term = jnp.exp(
        jnp.arange(0, d_model, 2, dtype=jnp.float32) * (-math.log(10000.0) / d_model)
    )                                                                         # (ceil(d/2),)
    angles = position * div_term                                              # (max_len, ceil(d/2))
    pe = jnp.zeros((max_len, d_model), dtype=jnp.float32)
    pe = pe.at[:, 0::2].set(jnp.sin(angles))
    pe = pe.at[:, 1::2].set(jnp.cos(angles)[:, : d_model // 2])
    return pe


# ----------------------------------------------------------------------------
# Kernel: one blocked broadcast add (works for both layouts below).
# ----------------------------------------------------------------------------
def _add_pe_kernel(x_ref, pe_ref, o_ref):
    # Layout A: x/pe/o all (TR, D).  Layout B: x/o (TB, CT), pe (1, CT) and the
    # add broadcasts pe over the batch sublanes.
    o_ref[...] = x_ref[...] + pe_ref[...]


# ----------------------------------------------------------------------------
# Tiling helpers.
# ----------------------------------------------------------------------------
def _round_down(v: int, m: int) -> int:
    return (v // m) * m


def _round_up(v: int, m: int) -> int:
    return -(-v // m) * m


def _default_block_bytes() -> int:
    """Per-x-block byte budget, tuned per TPU generation."""
    try:
        kind = jax.devices()[0].device_kind.lower()
    except Exception:
        return 4 << 20
    if "v5 lite" in kind or "v5e" in kind or "v5lite" in kind:
        return 2 << 20   # v5e: 16 MiB scoped-VMEM default; 2 MiB already <5% step overhead
    if "v7" in kind:
        return 8 << 20   # v7x: 3.2 TB/s HBM; bigger tiles amortize the ~0.35us/step cost
    return 4 << 20       # v6e and everything else


def _row_tile(b: int, s: int, d: int, elems_budget: int) -> int:
    """Layout A row tile: multiple of 8, divides S, fits budget; >= 2 blocks when B == 1."""
    budget_rows = max(8, _round_down(max(elems_budget // d, 8), 8))
    cap = min(budget_rows, s)
    if b == 1 and s >= 16:
        cap = min(cap, max(8, _round_down(s // 2, 8)))   # keep >= 2 blocks for megacore
    tr = max(8, _round_down(cap, 8))
    while tr > 8 and s % tr != 0:
        tr -= 8
    return tr


def _batch_and_col_tiles(b: int, n: int, itemsize: int, elems_budget: int):
    """Layout B tiles: batch tile (multiple of 8 or full B) + 128-aligned column tile."""
    # Keep each per-row contiguous chunk >= ~8 KiB so large B doesn't degrade the
    # block DMA into many short strided transfers.
    chunk_elems = max(128, _round_down(max(8192 // itemsize, 128), 128))
    if b > 8 and b % 8 == 0:
        tb = max(8, min(b, _round_down(max(elems_budget // chunk_elems, 8), 8)))
    else:
        tb = b                               # full batch dim is always layout-legal
    if n <= 128:
        return tb, n                         # tiny row: full lane dim, single col block
    ct = max(128, _round_down(min(n, elems_budget // tb), 128))
    if -(-b // tb) == 1:                     # single batch block: force >= 2 column
        ct = min(ct, max(128, _round_up(_round_up(n, 2) // 2, 128)))   # blocks (megacore)
    return tb, ct


# ----------------------------------------------------------------------------
# Forward wrapper.
# ----------------------------------------------------------------------------
def positional_encoding_forward(
    x: jnp.ndarray,
    pe_table: jnp.ndarray,
    *,
    max_block_bytes=None,
    vmem_limit_bytes: int = 48 << 20,
    in_place: bool = False,
) -> jnp.ndarray:
    """x: (B, S, D); pe_table: (max_len, D).  Returns x + pe[:S] (same dtype as x)."""
    if x.ndim != 3:
        raise ValueError(f"expected x of shape (batch, seq, d_model), got {x.shape}")
    b, s, d = x.shape
    max_len, d_pe = pe_table.shape
    if d_pe != d:
        raise ValueError(f"d_model mismatch: x has {d}, pe_table has {d_pe}")
    if s > max_len:
        raise ValueError(f"seq_len {s} exceeds positional-encoding max_len {max_len}")

    dtype = x.dtype
    itemsize = jnp.dtype(dtype).itemsize
    if max_block_bytes is None:
        max_block_bytes = _default_block_bytes()
    elems_budget = max(128, max_block_bytes // itemsize)

    # Cast pe once in the wrapper.  (For bf16/fp8 activations this double-rounds
    # the table vs. an fp32 in-kernel add — numerically negligible, and keeps pe
    # HBM traffic at activation width.)
    pe_slice = pe_table[:s, :].astype(dtype)

    n = s * d
    use_row_layout = (s % 8 == 0) and (d % 128 == 0) and (8 * d <= 2 * elems_budget)

    if use_row_layout:
        # Layout A: (B*S, D) — sublane- and lane-dense, fully contiguous block DMA.
        x2 = x.reshape(b * s, d)
        pe2 = pe_slice                                   # (S, D)
        tr = _row_tile(b, s, d, elems_budget)
        n_pe_blocks = s // tr
        grid = (b * s // tr,)
        in_specs = [
            pl.BlockSpec((tr, d), lambda i: (i, 0)),
            pl.BlockSpec((tr, d), lambda i: (i % n_pe_blocks, 0)),
        ]
        out_specs = pl.BlockSpec((tr, d), lambda i: (i, 0))
        dim_semantics = ("parallel",)
        out_shape2 = (b * s, d)
    else:
        # Layout B: (B, S*D) lane-dense flatten.  Column tile is a multiple of 128,
        # so a ragged trailing block is legal (Pallas masks the tail).
        x2 = x.reshape(b, n)
        pe2 = pe_slice.reshape(1, n)
        tb, ct = _batch_and_col_tiles(b, n, itemsize, elems_budget)
        grid = (pl.cdiv(b, tb), pl.cdiv(n, ct))
        in_specs = [
            pl.BlockSpec((tb, ct), lambda bi, ci: (bi, ci)),
            pl.BlockSpec((1, ct), lambda bi, ci: (0, ci)),
        ]
        out_specs = pl.BlockSpec((tb, ct), lambda bi, ci: (bi, ci))
        dim_semantics = ("parallel", "parallel")
        out_shape2 = (b, n)

    cost = pl.CostEstimate(
        flops=b * n,
        transcendentals=0,
        bytes_accessed=(2 * b * n + n) * itemsize,   # read x, write out, read pe once
    )

    out2 = pl.pallas_call(
        _add_pe_kernel,
        out_shape=jax.ShapeDtypeStruct(out_shape2, dtype),
        grid_spec=pltpu.PrefetchScalarGridSpec(
            num_scalar_prefetch=0,
            grid=grid,
            in_specs=in_specs,
            out_specs=out_specs,
        ),
        compiler_params=pltpu.CompilerParams(
            dimension_semantics=dim_semantics,
            vmem_limit_bytes=vmem_limit_bytes,
        ),
        cost_estimate=cost,
        input_output_aliases=({0: 0} if in_place else {}),
    )(x2, pe2)

    return out2.reshape(b, s, d)


# ----------------------------------------------------------------------------
# Self-test.
# ----------------------------------------------------------------------------
if __name__ == "__main__":
    key = jax.random.PRNGKey(0)
    k1, k2, k3 = jax.random.split(key, 3)
    max_len = 500

    # 1) Small module-like shape (Layout B path; grid splits the 256 flattened cols).
    b1, s1, d1 = 2, 8, 32
    x1 = jax.random.normal(k1, (b1, s1, d1), dtype=jnp.float32)
    pe1 = make_positional_encoding_table(d1, max_len)
    ref1 = x1 + pe1[None, :s1, :]
    out1 = jax.block_until_ready(positional_encoding_forward(x1, pe1))
    assert out1.shape == (b1, s1, d1)
    assert jnp.allclose(out1, ref1, atol=1e-6, rtol=1e-6)

    # 2) Force a multi-step column pipeline with a tiny byte budget (Layout B, grid=(1, 8)).
    b2, s2, d2 = 4, 16, 64
    x2 = jax.random.normal(k2, (b2, s2, d2), dtype=jnp.float32)
    pe2 = make_positional_encoding_table(d2, max_len)
    ref2 = x2 + pe2[None, :s2, :]
    out2 = jax.block_until_ready(
        positional_encoding_forward(x2, pe2, max_block_bytes=2048)
    )
    assert jnp.allclose(out2, ref2, atol=1e-6, rtol=1e-6)

    # 3) Layout A (D % 128 == 0): sublane+lane dense, row tile < S so the pe
    #    index_map wraps with i % (S // TR).
    b3, s3, d3 = 2, 16, 128
    x3 = jax.random.normal(k3, (b3, s3, d3), dtype=jnp.float32)
    pe3 = make_positional_encoding_table(d3, max_len)
    ref3 = x3 + pe3[None, :s3, :]
    out3 = jax.block_until_ready(
        positional_encoding_forward(x3, pe3, max_block_bytes=8 * 128 * 4)  # TR = 8
    )
    assert jnp.allclose(out3, ref3, atol=1e-6, rtol=1e-6)

    # 4) In-place (buffer-donating) variant on the Layout A path.
    fwd_inplace = jax.jit(
        lambda xx, pp: positional_encoding_forward(xx, pp, in_place=True),
        donate_argnums=(0,),
    )
    out4 = jax.block_until_ready(fwd_inplace(x3, pe3))
    assert jnp.allclose(out4, ref3, atol=1e-6, rtol=1e-6)
    # x3's buffer is donated above; do not use x3 past this point.

    print("KERNEL_OK")
</pallas_src>

<mosaic_0001>
module attributes {stable_mosaic.version = 11 : i64} {
  func.func @_add_pe_kernel(%arg0: i32, %arg1: i32, %arg2: memref<2x128xf32, #tpu.memory_space<vmem>>, %arg3: memref<1x128xf32, #tpu.memory_space<vmem>>, %arg4: memref<2x128xf32, #tpu.memory_space<vmem>>) attributes {dimension_semantics = [#tpu.dimension_semantics<parallel>, #tpu.dimension_semantics<parallel>], iteration_bounds = array<i64: 1, 2>, scalar_prefetch = 0 : i64, scratch_operands = 0 : i64, tpu.core_type = #tpu.core_type<tc>, window_params = [{transform_indices = @transform_0, window_bounds = array<i64: 2, 128>}, {transform_indices = @transform_1, window_bounds = array<i64: 1, 128>}, {transform_indices = @transform_2, window_bounds = array<i64: 2, 128>}]} {
    %c0 = arith.constant 0 : index
    %c0_0 = arith.constant 0 : index
    %0 = vector.load %arg2[%c0, %c0_0] : memref<2x128xf32, #tpu.memory_space<vmem>>, vector<2x128xf32>
    %c0_1 = arith.constant 0 : index
    %c0_2 = arith.constant 0 : index
    %1 = vector.load %arg3[%c0_1, %c0_2] : memref<1x128xf32, #tpu.memory_space<vmem>>, vector<1x128xf32>
    %2 = vector.broadcast %1 : vector<1x128xf32> to vector<2x128xf32>
    %3 = arith.addf %0, %2 : vector<2x128xf32>
    %c0_3 = arith.constant 0 : index
    %c0_4 = arith.constant 0 : index
    %4 = vector.load %arg4[%c0_3, %c0_4] : memref<2x128xf32, #tpu.memory_space<vmem>>, vector<2x128xf32>
    tpu.vector_store %arg4[%c0_3, %c0_4], %3 {strides = array<i32>} : memref<2x128xf32, #tpu.memory_space<vmem>>, vector<2x128xf32>,
    return
  }
  func.func @transform_0(%arg0: i32, %arg1: i32) -> (i32, i32) {
    %c0_i32 = arith.constant 0 : i32
    return %arg0, %arg1 : i32, i32
  }
  func.func @transform_1(%arg0: i32, %arg1: i32) -> (i32, i32) {
    %c0_i32 = arith.constant 0 : i32
    %c0_i32_0 = arith.constant 0 : i32
    return %c0_i32, %arg1 : i32, i32
  }
  func.func @transform_2(%arg0: i32, %arg1: i32) -> (i32, i32) {
    %c0_i32 = arith.constant 0 : i32
    return %arg0, %arg1 : i32, i32
  }
}

</mosaic_0001>

<llo_original>
// kernel: tpu_custom_call.1
$region0: #{tpu_custom_call.1}
  #allocation0 [shape = 'u32[]', space=smem, size = 0x4, offset = 0x4, fixed_abs, tag = 'smem constant byte address 0x4 - core index']
  #allocation1 [shape = 'u32[72,128]{1,0:T(1,128)}', space=vmem, size = 0x9000, scoped, tag = 'internal scratch']
  %s0 = inlined_call_operand.hbm [shape: f32[2,256], index: 0, kind: input, shape index: {}]
  %s1 = inlined_call_operand.hbm [shape: f32[1,256], index: 1, kind: input, shape index: {}]
  %s2 = inlined_call_operand.hbm [shape: f32[2,256], index: 2, kind: output, shape index: {}]
  %s3 = sld [smem:[#allocation0]]
  $region49: #{tpu_custom_call.1} parent=0
    _
  %s5 = ssub.s32 1, %s3
  %s6 = scalar_select 0, %s5, %s3
  $region1: #{tpu_custom_call.1} parent=0
    #allocation2 [shape = 'u8[2048]{0}', space=vmem, size = 0x800, scoped, tag = 'input window, operand 0']
    #allocation3 [shape = 's32[2]{0}', space=sflag, size = 0x8, scoped, tag = 'scoped memory for tpu_custom_call.1']
    #allocation4 [shape = 's32[2]{0}', space=sflag, size = 0x8, scoped, tag = 'scoped memory for tpu_custom_call.1']
    #allocation5 [shape = 'u8[1024]{0}', space=vmem, size = 0x400, scoped, tag = 'input window, operand 1']
    #allocation6 [shape = 's32[2]{0}', space=sflag, size = 0x8, scoped, tag = 'scoped memory for tpu_custom_call.1']
    #allocation7 [shape = 'u8[2048]{0}', space=vmem, size = 0x800, scoped, tag = 'output window, operand 0']
    %7 = vsyncpa [#allocation3], 0
    %s8 = scalar_lea.sflag [#allocation3], 1
    %9 = vsyncpa %s8, 0
    %10 = vsyncpa [#allocation6], 0
    %s11 = scalar_lea.sflag [#allocation6], 1
    %12 = vsyncpa %s11, 0
    %13 = vsyncpa [#allocation4], 0
    %s14 = scalar_lea.sflag [#allocation4], 1
    %15 = vsyncpa %s14, 0
    loop: start=0, step=1, limit=4
    $region2: #{tpu_custom_call.1} parent=1 // loop_pre_header
      _
    $region3: #{tpu_custom_call.1} parent=1 // loop_header
      %s17 = sphi 0, %s21
      %p18 = scmp.ge.s32.totalorder %s17, 4
      %s24 = sphi 0, %s36
      %s25 = sphi 0, %s32
      %s26 = sphi 0, %s24
      %s27 = sphi 0, %s25
      %s28 = sphi 0, %s26
      %s29 = sphi 0, %s27
      %s41 = sphi 0, %s43
      %s44 = sphi 0, %s41
      %s45 = sphi 0, %s44
      %s61 = sphi 0, %s45
      %s67 = sphi 0, %s69
      %s70 = sphi 0, %s67
      %s71 = sphi 0, %s70
      %s87 = sphi 0, %s71
      %s95 = sphi 0, %s97
      %s98 = sphi 0, %s95
      %s99 = sphi 0, %s98
      %s115 = sphi 0, %s99
    $region4: #{tpu_custom_call.1} parent=1 // loop_header_branch
      %20 = sbr.rel (%p18) target = $region8
    $region5: #{tpu_custom_call.1} parent=1 // loop_body
      %s22 = ssub.s32 %s17, 1
      %s23 = ssub.s32 %s17, 2
      %s30 = sadd.s32 1, %s25
      %p31 = scmp.ge.s32.totalorder %s30, 2
      %s32 = scalar_select %p31, 0, %s30
      %s33 = sadd.s32 1, %s24
      %s34 = scalar_select %p31, %s33, %s24
      %p35 = scmp.ge.s32.totalorder %s34, 1
      %s36 = scalar_select %p35, 0, %s34
      %s37 = ssub.s32 %s24, %s36
      %s38 = ssub.s32 %s25, %s32
      %s39 = sor.u32 %s37, %s38
      %p40 = scmp.eq.s32.totalorder %s39, 0
      %s42 = sadd.s32 %s41, 1
      %s43 = scalar_select %p40, %s41, %s42
      %p46 = pneg %p40
      %p47 = scmp.eq.s32.totalorder %s17, 1
      %p48 = por %p46, %p47
      %p49 = scmp.ne.s32.totalorder %s41, %s44
      %p50 = scmp.eq.s32.totalorder %s17, 0
      %p51 = por %p49, %p50
      %p52 = scmp.ne.s32.totalorder %s41, %s44
      %p53 = scmp.eq.s32.totalorder %s22, 1
      %p54 = por %p52, %p53
      %p55 = scmp.ne.s32.totalorder %s44, %s45
      %p56 = scmp.eq.s32.totalorder %s22, 0
      %p57 = por %p55, %p56
      %p58 = scmp.ne.s32.totalorder %s44, %s45
      %p59 = scmp.eq.s32.totalorder %s23, 1
      %p60 = por %p58, %p59
      %p62 = scmp.ne.s32.totalorder %s45, %s61
      %p63 = scmp.eq.s32.totalorder %s23, 0
      %p64 = por %p62, %p63
      %s65 = ssub.s32 %s25, %s32
      %p66 = scmp.eq.s32.totalorder %s65, 0
      %s68 = sadd.s32 %s67, 1
      %s69 = scalar_select %p66, %s67, %s68
      %p72 = pneg %p66
      %p73 = scmp.eq.s32.totalorder %s17, 1
      %p74 = por %p72, %p73
      %p75 = scmp.ne.s32.totalorder %s67, %s70
      %p76 = scmp.eq.s32.totalorder %s17, 0
      %p77 = por %p75, %p76
      %p78 = scmp.ne.s32.totalorder %s67, %s70
      %p79 = scmp.eq.s32.totalorder %s22, 1
      %p80 = por %p78, %p79
      %p81 = scmp.ne.s32.totalorder %s70, %s71
      %p82 = scmp.eq.s32.totalorder %s22, 0
      %p83 = por %p81, %p82
      %p84 = scmp.ne.s32.totalorder %s70, %s71
      %p85 = scmp.eq.s32.totalorder %s23, 1
      %p86 = por %p84, %p85
      %p88 = scmp.ne.s32.totalorder %s71, %s87
      %p89 = scmp.eq.s32.totalorder %s23, 0
      %p90 = por %p88, %p89
      %s91 = ssub.s32 %s24, %s36
      %s92 = ssub.s32 %s25, %s32
      %s93 = sor.u32 %s91, %s92
      %p94 = scmp.eq.s32.totalorder %s93, 0
      %s96 = sadd.s32 %s95, 1
      %s97 = scalar_select %p94, %s95, %s96
      %p100 = pneg %p94
      %p101 = scmp.eq.s32.totalorder %s17, 1
      %p102 = por %p100, %p101
      %p103 = scmp.ne.s32.totalorder %s95, %s98
      %p104 = scmp.eq.s32.totalorder %s17, 0
      %p105 = por %p103, %p104
      %p106 = scmp.ne.s32.totalorder %s95, %s98
      %p107 = scmp.eq.s32.totalorder %s22, 1
      %p108 = por %p106, %p107
      %p109 = scmp.ne.s32.totalorder %s98, %s99
      %p110 = scmp.eq.s32.totalorder %s22, 0
      %p111 = por %p109, %p110
      %p112 = scmp.ne.s32.totalorder %s98, %s99
      %p113 = scmp.eq.s32.totalorder %s23, 1
      %p114 = por %p112, %p113
      %p116 = scmp.ne.s32.totalorder %s99, %s115
      %p117 = scmp.eq.s32.totalorder %s23, 0
      %p118 = por %p116, %p117
      %p119 = scmp.le.s32.totalorder 1, %s17
      %p120 = scmp.lt.s32.totalorder %s17, 3
      %p121 = pnand %p119, %p120
      %p122 = pneg %p121
      // Predicated region
      $region9: #{tpu_custom_call.1} parent=5 // pred_check
        _
      $region10: #{tpu_custom_call.1} parent=5 // pred_check_branch
        %124 = sbr.rel (%p121) target = $region12
      $region11: #{tpu_custom_call.1} parent=5 // pred_region
        %s125 = ssub.s32 %s17, 1
      $region12: #{tpu_custom_call.1} parent=5 // pred_fallthru
        _
      %p126 = scmp.lt.s32.totalorder %s17, 2
      // Predicated region
      $region13: #{tpu_custom_call.1} parent=5 // pred_check
        %p127 = pneg %p126
      $region14: #{tpu_custom_call.1} parent=5 // pred_check_branch
        %129 = sbr.rel (%p127) target = $region16
      $region15: #{tpu_custom_call.1} parent=5 // pred_region
        // Predicated region
        $region17: #{tpu_custom_call.1} parent=15 // pred_check
          %p130 = pneg %p51
        $region18: #{tpu_custom_call.1} parent=15 // pred_check_branch
          %132 = sbr.rel (%p130) target = $region20
        $region19: #{tpu_custom_call.1} parent=15 // pred_region
          %s133 = sand.u32 %s41, 1
          %s134 = scalar_lea.sflag [#allocation3], %s133
          %s135 = sand.u32 %s41, 1
          %s136 = smul.addr %s135, 2
          %s137 = scalar_lea.vmem [#allocation2], %s136
          %139 = vsyncadd %s134, 0
          %s140 = smul.addr %s24, 2
          %s141 = sadd.s32 %s25, %s140
          %s142 = smul.addr %s141, 2
          %s143 = scalar_lea.hbm %s0, %s142
          %s145 = sshll.u32 %s143, 4
          %s146 = int_to_ptr.hbm [resolvable:$true] %s145
          %s147 = sshll.u32 %s137, 4
          %s148 = int_to_ptr.vmem [resolvable:$true] %s147
          %150 = dma.hbm_to_vmem [thread:$0]  %s146, 32, %s148, %s134
        $region20: #{tpu_custom_call.1} parent=15 // pred_fallthru
          _
        // Predicated region
        $region21: #{tpu_custom_call.1} parent=15 // pred_check
          %p151 = pneg %p77
        $region22: #{tpu_custom_call.1} parent=15 // pred_check_branch
          %153 = sbr.rel (%p151) target = $region24
        $region23: #{tpu_custom_call.1} parent=15 // pred_region
          %s154 = sand.u32 %s67, 1
          %s155 = scalar_lea.sflag [#allocation6], %s154
          %s156 = sand.u32 %s67, 1
          %s157 = scalar_lea.vmem [#allocation5], %s156
          %159 = vsyncadd %s155, 0
          %s160 = scalar_lea.hbm %s1, %s25
          %s162 = sshll.u32 %s160, 4
          %s163 = int_to_ptr.hbm [resolvable:$true] %s162
          %s164 = sshll.u32 %s157, 4
          %s165 = int_to_ptr.vmem [resolvable:$true] %s164
          %167 = dma.hbm_to_vmem [thread:$0]  %s163, 16, %s165, %s155
        $region24: #{tpu_custom_call.1} parent=15 // pred_fallthru
          _
      $region16: #{tpu_custom_call.1} parent=5 // pred_fallthru
        _
      %p168 = scmp.le.s32.totalorder 1, %s17
      %p169 = scmp.lt.s32.totalorder %s17, 3
      %p170 = pnand %p168, %p169
      %p171 = pneg %p170
      // Predicated region
      $region25: #{tpu_custom_call.1} parent=5 // pred_check
        _
      $region26: #{tpu_custom_call.1} parent=5 // pred_check_branch
        %173 = sbr.rel (%p170) target = $region28
      $region27: #{tpu_custom_call.1} parent=5 // pred_region
        %s174 = ssub.s32 %s17, 1
        %s175 = sand.u32 %s44, 1
        %s176 = scalar_lea.sflag [#allocation3], %s175
        %s177 = sand.u32 %s44, 1
        %s178 = smul.addr %s177, 2
        %s179 = scalar_lea.vmem [#allocation2], %s178
        // Predicated region
        $region29: #{tpu_custom_call.1} parent=27 // pred_check
          %p180 = pneg %p57
        $region30: #{tpu_custom_call.1} parent=27 // pred_check_branch
          %182 = sbr.rel (%p180) target = $region32
        $region31: #{tpu_custom_call.1} parent=27 // pred_region
          %184 = dma.done %s176, 32
        $region32: #{tpu_custom_call.1} parent=27 // pred_fallthru
          _
        %s185 = sand.u32 %s70, 1
        %s186 = scalar_lea.sflag [#allocation6], %s185
        %s187 = sand.u32 %s70, 1
        %s188 = scalar_lea.vmem [#allocation5], %s187
        // Predicated region
        $region33: #{tpu_custom_call.1} parent=27 // pred_check
          %p189 = pneg %p83
        $region34: #{tpu_custom_call.1} parent=27 // pred_check_branch
          %191 = sbr.rel (%p189) target = $region36
        $region35: #{tpu_custom_call.1} parent=27 // pred_region
          %193 = dma.done %s186, 16
        $region36: #{tpu_custom_call.1} parent=27 // pred_fallthru
          _
        %s194 = sand.u32 %s44, 1
        %s195 = scalar_lea.sflag [#allocation3], %s194
        %s196 = sand.u32 %s44, 1
        %s197 = smul.addr %s196, 2
        %s198 = scalar_lea.vmem [#allocation2], %s197
        %p199 = pneg %p57
        %p200 = pneg %p54
        %s201 = sand.u32 %s70, 1
        %s202 = scalar_lea.sflag [#allocation6], %s201
        %s203 = sand.u32 %s70, 1
        %s204 = scalar_lea.vmem [#allocation5], %s203
        %p205 = pneg %p83
        %p206 = pneg %p80
        %p207 = pneg %p111
        %p208 = pneg %p108
        %s209 = sand.u32 %s98, 1
        %s210 = scalar_lea.sflag [#allocation4], %s209
        %s211 = sand.u32 %s98, 1
        %s212 = smul.addr %s211, 2
        %s213 = scalar_lea.vmem [#allocation7], %s212
        %v214 = vld [vmem:[%s179] sm:$0x3]
        %v215 = vld [vmem:[%s188] sm:$0x1]
        %v217 = vperm.slane %v215, 0
        %v219 = vadd.f32 %v214, %v217
        %220 = vst [vmem:[%s213] sm:$0x3] %v219
        %s221 = sand.u32 %s98, 1
        %s222 = scalar_lea.sflag [#allocation4], %s221
        %s223 = sand.u32 %s98, 1
        %s224 = smul.addr %s223, 2
        %s225 = scalar_lea.vmem [#allocation7], %s224
        // Predicated region
        $region37: #{tpu_custom_call.1} parent=27 // pred_check
          %p226 = pneg %p108
        $region38: #{tpu_custom_call.1} parent=27 // pred_check_branch
          %228 = sbr.rel (%p226) target = $region40
        $region39: #{tpu_custom_call.1} parent=27 // pred_region
          %230 = vsyncadd %s222, 0
          %s231 = smul.addr %s26, 2
          %s232 = sadd.s32 %s27, %s231
          %s233 = smul.addr %s232, 2
          %s234 = scalar_lea.hbm %s2, %s233
          %s236 = sshll.u32 %s225, 4
          %s237 = int_to_ptr.vmem [resolvable:$true] %s236
          %s238 = sshll.u32 %s234, 4
          %s239 = int_to_ptr.hbm [resolvable:$true] %s238
          %241 = dma.vmem_to_hbm [thread:$0]  %s237, 32, %s239, %s222
        $region40: #{tpu_custom_call.1} parent=27 // pred_fallthru
          _
      $region28: #{tpu_custom_call.1} parent=5 // pred_fallthru
        _
      %p242 = scmp.le.s32.totalorder 2, %s17
      // Predicated region
      $region41: #{tpu_custom_call.1} parent=5 // pred_check
        %p243 = pneg %p242
      $region42: #{tpu_custom_call.1} parent=5 // pred_check_branch
        %245 = sbr.rel (%p243) target = $region44
      $region43: #{tpu_custom_call.1} parent=5 // pred_region
        %s246 = ssub.s32 %s17, 2
        // Predicated region
        $region45: #{tpu_custom_call.1} parent=43 // pred_check
          %p247 = pneg %p114
        $region46: #{tpu_custom_call.1} parent=43 // pred_check_branch
          %249 = sbr.rel (%p247) target = $region48
        $region47: #{tpu_custom_call.1} parent=43 // pred_region
          %s250 = sand.u32 %s99, 1
          %s251 = scalar_lea.sflag [#allocation4], %s250
          %s252 = sand.u32 %s99, 1
          %s253 = smul.addr %s252, 2
          %s254 = scalar_lea.vmem [#allocation7], %s253
          %256 = dma.done %s251, 32
        $region48: #{tpu_custom_call.1} parent=43 // pred_fallthru
          _
      $region44: #{tpu_custom_call.1} parent=5 // pred_fallthru
        _
    $region6: #{tpu_custom_call.1} parent=1 // loop_footer
      %s21 = sadd.s32 1, %s17
    $region7: #{tpu_custom_call.1} parent=1 // loop_footer_branch
      %16 = sbr.rel target = $region3
    $region8: #{tpu_custom_call.1} parent=1 // loop_exit
      _
    %257 = vsyncpa [#allocation3], 1
    %s258 = scalar_lea.sflag [#allocation3], 1
    %259 = vsyncpa %s258, 1
    %260 = vsyncpa [#allocation6], 1
    %s261 = scalar_lea.sflag [#allocation6], 1
    %262 = vsyncpa %s261, 1
    %263 = vsyncpa [#allocation4], 1
    %s264 = scalar_lea.sflag [#allocation4], 1
    %265 = vsyncpa %s264, 1

</llo_original>
